<compile_context>
chip_gen: v7x
topology: tpu7x:2x2x1
jax: 0.10.0
libtpu: 0.0.40
codegen_flags: <defaults>
</compile_context>

<pallas_src>
import functools

import jax
import jax.numpy as jnp
from jax import lax
from jax.experimental import pallas as pl
from jax.experimental.pallas import tpu as pltpu


def _dc_ce_kernel(x_ref, t_ref, ce_out_ref, dc_out_ref,
                  tp_acc, sump_acc, cnt_acc, ce_acc, *,
                  C, TN, N, need_mask, smooth):
    nk = pl.program_id(1)

    @pl.when(nk == 0)
    def _():
        tp_acc[...] = jnp.zeros_like(tp_acc)
        sump_acc[...] = jnp.zeros_like(sump_acc)
        cnt_acc[...] = jnp.zeros_like(cnt_acc)
        ce_acc[...] = jnp.zeros_like(ce_acc)

    x = x_ref[0].astype(jnp.float32)              # (C, TN) logits (upcast here)
    t = t_ref[0]                                  # (1, TN) int32 labels

    # --- softmax pieces over the channel (sublane) axis ---
    x_max = jnp.max(x, axis=0, keepdims=True)     # (1, TN)
    e = jnp.exp(x - x_max)                        # (C, TN)  EUP
    s = jnp.sum(e, axis=0, keepdims=True)         # (1, TN)
    inv_s = pl.reciprocal(s, approx=False)        # (1, TN)
    log_s = jnp.log(s)                            # (1, TN)  EUP

    # --- one-hot of the label map (padded labels are -1 -> all-zero) ---
    ch = lax.broadcasted_iota(jnp.int32, (C, TN), 0)
    onehot = (ch == t).astype(jnp.float32)        # (C, TN)

    if need_mask:
        col = nk * TN + lax.broadcasted_iota(jnp.int32, (1, TN), 1)
        valid = (col < N).astype(jnp.float32)     # (1, TN)
        inv_s_eff = inv_s * valid                 # cheap (1, TN) mask fold
    else:
        valid = None
        inv_s_eff = inv_s

    p = e * inv_s_eff                             # (C, TN); zero on padded cols

    # --- soft dice partial stats (fp/fn recovered algebraically later) ---
    tp_acc[...] += jnp.sum(p * onehot, axis=1, keepdims=True)   # (C, 1)
    sump_acc[...] += jnp.sum(p, axis=1, keepdims=True)          # (C, 1)
    cnt_acc[...] += jnp.sum(onehot, axis=1, keepdims=True)      # (C, 1)

    # --- cross-entropy: per-pixel CE = log(sum_e) + x_max - x[target] ---
    x_t = jnp.sum(onehot * x, axis=0, keepdims=True)            # (1, TN)
    ce_row = log_s + x_max - x_t
    if need_mask:
        ce_row = ce_row * valid
    ce_acc[...] += jnp.sum(ce_row, axis=1, keepdims=True)       # (1, 1)

    @pl.when(nk == pl.num_programs(1) - 1)
    def _():
        tp = tp_acc[...]                                        # (C, 1)
        # fp = sum_p - tp, fn = cnt - tp  =>  2tp+fp+fn = sum_p + cnt
        dc = (2.0 * tp + smooth) / (sump_acc[...] + cnt_acc[...] + smooth)
        dc_sum = jnp.sum(dc, keepdims=True)                     # (1, 1)
        ce_out_ref[0] = jnp.broadcast_to(ce_acc[...], (1, 128))
        dc_out_ref[0] = jnp.broadcast_to(dc_sum, (1, 128))


def _round_up(x, m):
    return (x + m - 1) // m * m


def dc_and_ce_loss(net_output, target, *, weight_ce=1.0, weight_dice=1.0,
                   smooth=1.0, tile_n=None):
    """Pallas implementation of DC_and_CE_loss.forward (aggregate='sum')."""
    B, C, H, W = net_output.shape
    N = H * W

    # Keep logits at their native dtype (no wrapper-side upcast -> half the
    # DMA bytes for bf16 nets); upcast happens inside the kernel.
    x = net_output.reshape(B, C, N)
    t = target.reshape(B, 1, N).astype(jnp.int32)

    if tile_n is None:
        # Aim for ~2 MiB of logits per block; multiple of 128 lanes; <= N.
        itemsize = jnp.dtype(x.dtype).itemsize
        tile_n = ((1 << 21) // max(1, C * itemsize)) // 128 * 128
        tile_n = min(max(tile_n, 128), _round_up(N, 128))
    tile_n = max(128, _round_up(int(tile_n), 128))

    n_pad = _round_up(N, tile_n)
    need_mask = n_pad != N
    if need_mask:
        # Pad logits with zeros and labels with -1 (out-of-range class); the
        # kernel additionally lane-masks padded pixels out of CE / sum_p.
        x = jnp.pad(x, ((0, 0), (0, 0), (0, n_pad - N)))
        t = jnp.pad(t, ((0, 0), (0, 0), (0, n_pad - N)), constant_values=-1)

    num_n_blocks = n_pad // tile_n

    kernel = functools.partial(
        _dc_ce_kernel, C=C, TN=tile_n, N=N, need_mask=need_mask,
        smooth=float(smooth))

    ce_part, dc_part = pl.pallas_call(
        kernel,
        out_shape=(jax.ShapeDtypeStruct((B, 1, 128), jnp.float32),
                   jax.ShapeDtypeStruct((B, 1, 128), jnp.float32)),
        grid=(B, num_n_blocks),
        in_specs=[
            pl.BlockSpec((1, C, tile_n), lambda b, k: (b, 0, k)),
            pl.BlockSpec((1, 1, tile_n), lambda b, k: (b, 0, k)),
        ],
        out_specs=(
            pl.BlockSpec((1, 1, 128), lambda b, k: (b, 0, 0)),
            pl.BlockSpec((1, 1, 128), lambda b, k: (b, 0, 0)),
        ),
        scratch_shapes=[
            pltpu.VMEM((C, 1), jnp.float32),   # tp per channel
            pltpu.VMEM((C, 1), jnp.float32),   # sum_n p per channel
            pltpu.VMEM((C, 1), jnp.float32),   # one-hot count per channel
            pltpu.VMEM((1, 1), jnp.float32),   # running CE sum
        ],
        compiler_params=pltpu.CompilerParams(
            dimension_semantics=("parallel", "arbitrary")),
    )(x, t)

    # Tiny final reduction over the per-batch partials (keeps B "parallel").
    ce_total = jnp.sum(ce_part[:, 0, 0])
    dc_total = jnp.sum(dc_part[:, 0, 0])
    ce_loss = ce_total / (B * N)
    dc_loss = -dc_total / (B * C)
    # TODO(synk): torch CrossEntropyLoss ignore_index / class-weight kwargs are
    # not modeled (module is constructed with default ce_kwargs here).
    return weight_ce * ce_loss + weight_dice * dc_loss


def _reference_loss(net_output, target, *, weight_ce=1.0, weight_dice=1.0,
                    smooth=1.0):
    """Pure-JAX reference mirroring the PyTorch module."""
    B, C, H, W = net_output.shape
    x = net_output.astype(jnp.float32)
    labels = target[:, 0].astype(jnp.int32)                        # (B, H, W)
    onehot = jax.nn.one_hot(labels, C, axis=1, dtype=jnp.float32)  # (B,C,H,W)

    # Soft dice (batch_dice=False, do_bg=True, smooth=1.0, softmax nonlin)
    p = jax.nn.softmax(x, axis=1)
    tp = jnp.sum(p * onehot, axis=(2, 3))
    fp = jnp.sum(p * (1.0 - onehot), axis=(2, 3))
    fn = jnp.sum((1.0 - p) * onehot, axis=(2, 3))
    dc = (2.0 * tp + smooth) / (2.0 * tp + fp + fn + smooth)
    dc_loss = -jnp.mean(dc)

    # CrossentropyND (mean over all pixels)
    log_p = jax.nn.log_softmax(x, axis=1)
    ce_loss = -jnp.mean(jnp.sum(onehot * log_p, axis=1))

    return weight_ce * ce_loss + weight_dice * dc_loss


if __name__ == "__main__":
    key = jax.random.PRNGKey(0)
    k_x, k_t = jax.random.split(key)

    # Main check: the module-default small shape.
    B, C, H, W = 2, 4, 16, 16
    net_output = jax.random.normal(k_x, (B, C, H, W), dtype=jnp.float32)
    target = jax.random.randint(k_t, (B, 1, H, W), 0, C, dtype=jnp.int32)

    loss = dc_and_ce_loss(net_output, target)
    loss = jax.block_until_ready(loss)
    ref = _reference_loss(net_output, target)
    assert jnp.allclose(loss, ref, atol=1e-5, rtol=1e-5), (loss, ref)

    # Second check: non-128-multiple spatial size + small tile -> exercises
    # the multi-chunk accumulation and the tail lane-mask path.
    k_x2, k_t2 = jax.random.split(k_x)
    B2, C2, H2, W2 = 2, 5, 13, 13
    x2 = jax.random.normal(k_x2, (B2, C2, H2, W2), dtype=jnp.float32)
    t2 = jax.random.randint(k_t2, (B2, 1, H2, W2), 0, C2, dtype=jnp.int32)
    loss2 = jax.block_until_ready(dc_and_ce_loss(x2, t2, tile_n=128))
    ref2 = _reference_loss(x2, t2)
    assert jnp.allclose(loss2, ref2, atol=1e-5, rtol=1e-5), (loss2, ref2)

    print("KERNEL_OK")
</pallas_src>

<mosaic_0001>
module attributes {stable_mosaic.version = 11 : i64} {
  func.func @_dc_ce_kernel(%arg0: i32, %arg1: i32, %arg2: memref<1x4x256xf32, #tpu.memory_space<vmem>>, %arg3: memref<1x1x256xi32, #tpu.memory_space<vmem>>, %arg4: memref<1x1x128xf32, #tpu.memory_space<vmem>>, %arg5: memref<1x1x128xf32, #tpu.memory_space<vmem>>, %arg6: memref<4x1xf32, #tpu.memory_space<vmem>>, %arg7: memref<4x1xf32, #tpu.memory_space<vmem>>, %arg8: memref<4x1xf32, #tpu.memory_space<vmem>>, %arg9: memref<1x1xf32, #tpu.memory_space<vmem>>) attributes {dimension_semantics = [#tpu.dimension_semantics<parallel>, #tpu.dimension_semantics<arbitrary>], iteration_bounds = array<i64: 2, 1>, scalar_prefetch = 0 : i64, scratch_operands = 4 : i64, tpu.core_type = #tpu.core_type<tc>, window_params = [{transform_indices = @transform_0, window_bounds = array<i64: 1, 4, 256>}, {transform_indices = @transform_1, window_bounds = array<i64: 1, 1, 256>}, {transform_indices = @transform_2, window_bounds = array<i64: 1, 1, 128>}, {transform_indices = @transform_3, window_bounds = array<i64: 1, 1, 128>}]} {
    %c0_i32 = arith.constant 0 : i32
    %0 = arith.cmpi eq, %arg1, %c0_i32 : i32
    %1 = arith.extui %0 : i1 to i32
    %c0_i32_0 = arith.constant 0 : i32
    %2 = arith.cmpi ne, %1, %c0_i32_0 : i32
    scf.if %2 {
      %cst_30 = arith.constant 0.000000e+00 : f32
      %52 = vector.broadcast %cst_30 : f32 to vector<4x1xf32>
      %c0_31 = arith.constant 0 : index
      %c0_32 = arith.constant 0 : index
      %53 = vector.load %arg6[%c0_31, %c0_32] : memref<4x1xf32, #tpu.memory_space<vmem>>, vector<4x1xf32>
      tpu.vector_store %arg6[%c0_31, %c0_32], %52 {strides = array<i32>} : memref<4x1xf32, #tpu.memory_space<vmem>>, vector<4x1xf32>,
      %cst_33 = arith.constant 0.000000e+00 : f32
      %54 = vector.broadcast %cst_33 : f32 to vector<4x1xf32>
      %c0_34 = arith.constant 0 : index
      %c0_35 = arith.constant 0 : index
      %55 = vector.load %arg7[%c0_34, %c0_35] : memref<4x1xf32, #tpu.memory_space<vmem>>, vector<4x1xf32>
      tpu.vector_store %arg7[%c0_34, %c0_35], %54 {strides = array<i32>} : memref<4x1xf32, #tpu.memory_space<vmem>>, vector<4x1xf32>,
      %cst_36 = arith.constant 0.000000e+00 : f32
      %56 = vector.broadcast %cst_36 : f32 to vector<4x1xf32>
      %c0_37 = arith.constant 0 : index
      %c0_38 = arith.constant 0 : index
      %57 = vector.load %arg8[%c0_37, %c0_38] : memref<4x1xf32, #tpu.memory_space<vmem>>, vector<4x1xf32>
      tpu.vector_store %arg8[%c0_37, %c0_38], %56 {strides = array<i32>} : memref<4x1xf32, #tpu.memory_space<vmem>>, vector<4x1xf32>,
      %cst_39 = arith.constant 0.000000e+00 : f32
      %58 = vector.broadcast %cst_39 : f32 to vector<1x1xf32>
      %c0_40 = arith.constant 0 : index
      %c0_41 = arith.constant 0 : index
      %59 = vector.load %arg9[%c0_40, %c0_41] : memref<1x1xf32, #tpu.memory_space<vmem>>, vector<1x1xf32>
      tpu.vector_store %arg9[%c0_40, %c0_41], %58 {strides = array<i32>} : memref<1x1xf32, #tpu.memory_space<vmem>>, vector<1x1xf32>,
    } else {
    }
    %c0 = arith.constant 0 : index
    %c0_1 = arith.constant 0 : index
    %c0_2 = arith.constant 0 : index
    %3 = vector.load %arg2[%c0, %c0_1, %c0_2] : memref<1x4x256xf32, #tpu.memory_space<vmem>>, vector<1x4x256xf32>
    %4 = vector.shape_cast %3 : vector<1x4x256xf32> to vector<4x256xf32>
    %c0_3 = arith.constant 0 : index
    %c0_4 = arith.constant 0 : index
    %c0_5 = arith.constant 0 : index
    %5 = vector.load %arg3[%c0_3, %c0_4, %c0_5] : memref<1x1x256xi32, #tpu.memory_space<vmem>>, vector<1x1x256xi32>
    %6 = vector.shape_cast %5 : vector<1x1x256xi32> to vector<1x256xi32>
    %cst = arith.constant dense<0xFF800000> : vector<256xf32>
    %7 = vector.multi_reduction <maximumf>, %4, %cst [0] : vector<4x256xf32> to vector<256xf32>
    %8 = vector.shape_cast %7 : vector<256xf32> to vector<1x256xf32>
    %9 = vector.broadcast %8 : vector<1x256xf32> to vector<4x256xf32>
    %10 = arith.subf %4, %9 : vector<4x256xf32>
    %11 = math.exp %10 : vector<4x256xf32>
    %cst_6 = arith.constant dense<0.000000e+00> : vector<256xf32>
    %12 = vector.multi_reduction <add>, %11, %cst_6 [0] : vector<4x256xf32> to vector<256xf32>
    %13 = vector.shape_cast %12 : vector<256xf32> to vector<1x256xf32>
    %14 = tpu.reciprocal %13 : vector<1x256xf32> -> vector<1x256xf32>
    %15 = math.log %13 : vector<1x256xf32>
    %16 = tpu.iota {dimensions = array<i32: 0>} : vector<4x256xi32>
    %17 = vector.broadcast %6 : vector<1x256xi32> to vector<4x256xi32>
    %18 = arith.cmpi eq, %16, %17 : vector<4x256xi32>
    %19 = arith.extui %18 : vector<4x256xi1> to vector<4x256xi32>
    %20 = arith.sitofp %19 : vector<4x256xi32> to vector<4x256xf32>
    %21 = vector.broadcast %14 : vector<1x256xf32> to vector<4x256xf32>
    %22 = arith.mulf %11, %21 : vector<4x256xf32>
    %c0_7 = arith.constant 0 : index
    %c0_8 = arith.constant 0 : index
    %23 = vector.load %arg6[%c0_7, %c0_8] : memref<4x1xf32, #tpu.memory_space<vmem>>, vector<4x1xf32>
    %24 = arith.mulf %22, %20 : vector<4x256xf32>
    %cst_9 = arith.constant dense<0.000000e+00> : vector<4xf32>
    %25 = vector.multi_reduction <add>, %24, %cst_9 [1] : vector<4x256xf32> to vector<4xf32>
    %26 = vector.shape_cast %25 : vector<4xf32> to vector<4x1xf32>
    %27 = arith.addf %23, %26 : vector<4x1xf32>
    %c0_10 = arith.constant 0 : index
    %c0_11 = arith.constant 0 : index
    %28 = vector.load %arg6[%c0_10, %c0_11] : memref<4x1xf32, #tpu.memory_space<vmem>>, vector<4x1xf32>
    tpu.vector_store %arg6[%c0_10, %c0_11], %27 {strides = array<i32>} : memref<4x1xf32, #tpu.memory_space<vmem>>, vector<4x1xf32>,
    %c0_12 = arith.constant 0 : index
    %c0_13 = arith.constant 0 : index
    %29 = vector.load %arg7[%c0_12, %c0_13] : memref<4x1xf32, #tpu.memory_space<vmem>>, vector<4x1xf32>
    %cst_14 = arith.constant dense<0.000000e+00> : vector<4xf32>
    %30 = vector.multi_reduction <add>, %22, %cst_14 [1] : vector<4x256xf32> to vector<4xf32>
    %31 = vector.shape_cast %30 : vector<4xf32> to vector<4x1xf32>
    %32 = arith.addf %29, %31 : vector<4x1xf32>
    %c0_15 = arith.constant 0 : index
    %c0_16 = arith.constant 0 : index
    %33 = vector.load %arg7[%c0_15, %c0_16] : memref<4x1xf32, #tpu.memory_space<vmem>>, vector<4x1xf32>
    tpu.vector_store %arg7[%c0_15, %c0_16], %32 {strides = array<i32>} : memref<4x1xf32, #tpu.memory_space<vmem>>, vector<4x1xf32>,
    %c0_17 = arith.constant 0 : index
    %c0_18 = arith.constant 0 : index
    %34 = vector.load %arg8[%c0_17, %c0_18] : memref<4x1xf32, #tpu.memory_space<vmem>>, vector<4x1xf32>
    %cst_19 = arith.constant dense<0.000000e+00> : vector<4xf32>
    %35 = vector.multi_reduction <add>, %20, %cst_19 [1] : vector<4x256xf32> to vector<4xf32>
    %36 = vector.shape_cast %35 : vector<4xf32> to vector<4x1xf32>
    %37 = arith.addf %34, %36 : vector<4x1xf32>
    %c0_20 = arith.constant 0 : index
    %c0_21 = arith.constant 0 : index
    %38 = vector.load %arg8[%c0_20, %c0_21] : memref<4x1xf32, #tpu.memory_space<vmem>>, vector<4x1xf32>
    tpu.vector_store %arg8[%c0_20, %c0_21], %37 {strides = array<i32>} : memref<4x1xf32, #tpu.memory_space<vmem>>, vector<4x1xf32>,
    %39 = arith.mulf %20, %4 : vector<4x256xf32>
    %cst_22 = arith.constant dense<0.000000e+00> : vector<256xf32>
    %40 = vector.multi_reduction <add>, %39, %cst_22 [0] : vector<4x256xf32> to vector<256xf32>
    %41 = vector.shape_cast %40 : vector<256xf32> to vector<1x256xf32>
    %42 = arith.addf %15, %8 : vector<1x256xf32>
    %43 = arith.subf %42, %41 : vector<1x256xf32>
    %c0_23 = arith.constant 0 : index
    %c0_24 = arith.constant 0 : index
    %44 = vector.load %arg9[%c0_23, %c0_24] : memref<1x1xf32, #tpu.memory_space<vmem>>, vector<1x1xf32>
    %cst_25 = arith.constant dense<0.000000e+00> : vector<1xf32>
    %45 = vector.multi_reduction <add>, %43, %cst_25 [1] : vector<1x256xf32> to vector<1xf32>
    %46 = vector.shape_cast %45 : vector<1xf32> to vector<1x1xf32>
    %47 = arith.addf %44, %46 : vector<1x1xf32>
    %c0_26 = arith.constant 0 : index
    %c0_27 = arith.constant 0 : index
    %48 = vector.load %arg9[%c0_26, %c0_27] : memref<1x1xf32, #tpu.memory_space<vmem>>, vector<1x1xf32>
    tpu.vector_store %arg9[%c0_26, %c0_27], %47 {strides = array<i32>} : memref<1x1xf32, #tpu.memory_space<vmem>>, vector<1x1xf32>,
    %c0_i32_28 = arith.constant 0 : i32
    %49 = arith.cmpi eq, %arg1, %c0_i32_28 : i32
    %50 = arith.extui %49 : i1 to i32
    %c0_i32_29 = arith.constant 0 : i32
    %51 = arith.cmpi ne, %50, %c0_i32_29 : i32
    scf.if %51 {
      %c0_30 = arith.constant 0 : index
      %c0_31 = arith.constant 0 : index
      %52 = vector.load %arg6[%c0_30, %c0_31] : memref<4x1xf32, #tpu.memory_space<vmem>>, vector<4x1xf32>
      %cst_32 = arith.constant 2.000000e+00 : f32
      %53 = vector.broadcast %cst_32 : f32 to vector<4x1xf32>
      %54 = arith.mulf %53, %52 : vector<4x1xf32>
      %cst_33 = arith.constant 1.000000e+00 : f32
      %55 = vector.broadcast %cst_33 : f32 to vector<4x1xf32>
      %56 = arith.addf %54, %55 : vector<4x1xf32>
      %c0_34 = arith.constant 0 : index
      %c0_35 = arith.constant 0 : index
      %57 = vector.load %arg7[%c0_34, %c0_35] : memref<4x1xf32, #tpu.memory_space<vmem>>, vector<4x1xf32>
      %c0_36 = arith.constant 0 : index
      %c0_37 = arith.constant 0 : index
      %58 = vector.load %arg8[%c0_36, %c0_37] : memref<4x1xf32, #tpu.memory_space<vmem>>, vector<4x1xf32>
      %59 = arith.addf %57, %58 : vector<4x1xf32>
      %cst_38 = arith.constant 1.000000e+00 : f32
      %60 = vector.broadcast %cst_38 : f32 to vector<4x1xf32>
      %61 = arith.addf %59, %60 : vector<4x1xf32>
      %62 = arith.divf %56, %61 : vector<4x1xf32>
      %63 = vector.shape_cast %62 : vector<4x1xf32> to vector<1x4x1xf32>
      %cst_39 = arith.constant dense<0.000000e+00> : vector<1xf32>
      %64 = vector.multi_reduction <add>, %63, %cst_39 [1, 2] : vector<1x4x1xf32> to vector<1xf32>
      %65 = vector.shape_cast %64 : vector<1xf32> to vector<1x1x1xf32>
      %66 = vector.extract %65[0, 0, 0] : f32 from vector<1x1x1xf32>
      %67 = vector.broadcast %66 : f32 to vector<1x1xf32>
      %c0_40 = arith.constant 0 : index
      %c0_41 = arith.constant 0 : index
      %68 = vector.load %arg9[%c0_40, %c0_41] : memref<1x1xf32, #tpu.memory_space<vmem>>, vector<1x1xf32>
      %69 = vector.shape_cast %68 : vector<1x1xf32> to vector<1x1xf32>
      %70 = vector.broadcast %69 : vector<1x1xf32> to vector<1x128xf32>
      %c0_42 = arith.constant 0 : index
      %c0_43 = arith.constant 0 : index
      %c0_44 = arith.constant 0 : index
      %71 = vector.load %arg4[%c0_42, %c0_43, %c0_44] : memref<1x1x128xf32, #tpu.memory_space<vmem>>, vector<1x1x128xf32>
      %72 = vector.shape_cast %71 : vector<1x1x128xf32> to vector<1x128xf32>
      %73 = vector.shape_cast %70 : vector<1x128xf32> to vector<1x1x128xf32>
      tpu.vector_store %arg4[%c0_42, %c0_43, %c0_44], %73 {strides = array<i32>} : memref<1x1x128xf32, #tpu.memory_space<vmem>>, vector<1x1x128xf32>,
      %74 = vector.shape_cast %67 : vector<1x1xf32> to vector<1x1xf32>
      %75 = vector.broadcast %74 : vector<1x1xf32> to vector<1x128xf32>
      %c0_45 = arith.constant 0 : index
      %c0_46 = arith.constant 0 : index
      %c0_47 = arith.constant 0 : index
      %76 = vector.load %arg5[%c0_45, %c0_46, %c0_47] : memref<1x1x128xf32, #tpu.memory_space<vmem>>, vector<1x1x128xf32>
      %77 = vector.shape_cast %76 : vector<1x1x128xf32> to vector<1x128xf32>
      %78 = vector.shape_cast %75 : vector<1x128xf32> to vector<1x1x128xf32>
      tpu.vector_store %arg5[%c0_45, %c0_46, %c0_47], %78 {strides = array<i32>} : memref<1x1x128xf32, #tpu.memory_space<vmem>>, vector<1x1x128xf32>,
    } else {
    }
    return
  }
  func.func @transform_0(%arg0: i32, %arg1: i32) -> (i32, i32, i32) {
    %c0_i32 = arith.constant 0 : i32
    %c0_i32_0 = arith.constant 0 : i32
    return %arg0, %c0_i32, %arg1 : i32, i32, i32
  }
  func.func @transform_1(%arg0: i32, %arg1: i32) -> (i32, i32, i32) {
    %c0_i32 = arith.constant 0 : i32
    %c0_i32_0 = arith.constant 0 : i32
    return %arg0, %c0_i32, %arg1 : i32, i32, i32
  }
  func.func @transform_2(%arg0: i32, %arg1: i32) -> (i32, i32, i32) {
    %c0_i32 = arith.constant 0 : i32
    %c0_i32_0 = arith.constant 0 : i32
    %c0_i32_1 = arith.constant 0 : i32
    return %arg0, %c0_i32, %c0_i32_0 : i32, i32, i32
  }
  func.func @transform_3(%arg0: i32, %arg1: i32) -> (i32, i32, i32) {
    %c0_i32 = arith.constant 0 : i32
    %c0_i32_0 = arith.constant 0 : i32
    %c0_i32_1 = arith.constant 0 : i32
    return %arg0, %c0_i32, %c0_i32_0 : i32, i32, i32
  }
}

</mosaic_0001>

<llo_original>
// kernel: tpu_custom_call.1
$region0: #{tpu_custom_call.1}
  #allocation0 [shape = 'u32[]', space=smem, size = 0x4, offset = 0x4, fixed_abs, tag = 'smem constant byte address 0x4 - core index']
  #allocation1 [shape = 'u32[144,128]{1,0:T(1,128)}', space=vmem, size = 0x12000, scoped, tag = 'internal scratch']
  #allocation2 [shape = 'f32[4,1]{1,0:T(4,128)}', space=vmem, size = 0x800, scoped, tag = 'scratch operand']
  #allocation3 [shape = 'f32[4,1]{1,0:T(4,128)}', space=vmem, size = 0x800, scoped, tag = 'scratch operand']
  #allocation4 [shape = 'f32[4,1]{1,0:T(4,128)}', space=vmem, size = 0x800, scoped, tag = 'scratch operand']
  #allocation5 [shape = 'f32[1,1]{1,0:T(1,128)}', space=vmem, size = 0x200, scoped, tag = 'scratch operand']
  %s0 = inlined_call_operand.hbm [shape: f32[2,4,256], index: 0, kind: input, shape index: {}]
  %s1 = inlined_call_operand.hbm [shape: s32[2,1,256], index: 1, kind: input, shape index: {}]
  %s2 = inlined_call_operand.hbm [shape: f32[2,1,128], index: 2, kind: output, shape index: {0}]
  %s3 = inlined_call_operand.hbm [shape: f32[2,1,128], index: 3, kind: output, shape index: {1}]
  %4 = xla_tuple %s2, %s3
  %s5 = sld [smem:[#allocation0]]
  $region65: #{tpu_custom_call.1} parent=0
    _
  %s7 = ssub.s32 1, %s5
  %s8 = scalar_select 0, %s7, %s5
  $region1: #{tpu_custom_call.1} parent=0
    #allocation6 [shape = 'u8[8192]{0}', space=vmem, size = 0x2000, scoped, tag = 'input window, operand 0']
    #allocation7 [shape = 's32[2]{0}', space=sflag, size = 0x8, scoped, tag = 'scoped memory for tpu_custom_call.1']
    #allocation8 [shape = 's32[2]{0}', space=sflag, size = 0x8, scoped, tag = 'scoped memory for tpu_custom_call.1']
    #allocation9 [shape = 'u8[2048]{0}', space=vmem, size = 0x800, scoped, tag = 'input window, operand 1']
    #allocation10 [shape = 's32[2]{0}', space=sflag, size = 0x8, scoped, tag = 'scoped memory for tpu_custom_call.1']
    #allocation11 [shape = 'u8[1024]{0}', space=vmem, size = 0x400, scoped, tag = 'output window, operand 0']
    #allocation12 [shape = 'u8[1024]{0}', space=vmem, size = 0x400, scoped, tag = 'output window, operand 1']
    #allocation13 [shape = 's32[2]{0}', space=sflag, size = 0x8, scoped, tag = 'scoped memory for tpu_custom_call.1']
    %9 = vsyncpa [#allocation7], 0
    %s10 = scalar_lea.sflag [#allocation7], 1
    %11 = vsyncpa %s10, 0
    %12 = vsyncpa [#allocation10], 0
    %s13 = scalar_lea.sflag [#allocation10], 1
    %14 = vsyncpa %s13, 0
    %15 = vsyncpa [#allocation8], 0
    %s16 = scalar_lea.sflag [#allocation8], 1
    %17 = vsyncpa %s16, 0
    %18 = vsyncpa [#allocation13], 0
    %s19 = scalar_lea.sflag [#allocation13], 1
    %20 = vsyncpa %s19, 0
    loop: start=0, step=1, limit=4
    $region2: #{tpu_custom_call.1} parent=1 // loop_pre_header
      _
    $region3: #{tpu_custom_call.1} parent=1 // loop_header
      %s22 = sphi 0, %s26
      %p23 = scmp.ge.s32.totalorder %s22, 4
      %s29 = sphi 0, %s41
      %s30 = sphi 0, %s37
      %s31 = sphi 0, %s29
      %s32 = sphi 0, %s30
      %s33 = sphi 0, %s31
      %s34 = sphi 0, %s32
      %s46 = sphi 0, %s48
      %s49 = sphi 0, %s46
      %s50 = sphi 0, %s49
      %s66 = sphi 0, %s50
      %s74 = sphi 0, %s76
      %s77 = sphi 0, %s74
      %s78 = sphi 0, %s77
      %s94 = sphi 0, %s78
      %s100 = sphi 0, %s102
      %s103 = sphi 0, %s100
      %s104 = sphi 0, %s103
      %s120 = sphi 0, %s104
      %s126 = sphi 0, %s128
      %s129 = sphi 0, %s126
      %s130 = sphi 0, %s129
      %s146 = sphi 0, %s130
    $region4: #{tpu_custom_call.1} parent=1 // loop_header_branch
      %25 = sbr.rel (%p23) target = $region8
    $region5: #{tpu_custom_call.1} parent=1 // loop_body
      %s27 = ssub.s32 %s22, 1
      %s28 = ssub.s32 %s22, 2
      %s35 = sadd.s32 1, %s30
      %p36 = scmp.ge.s32.totalorder %s35, 1
      %s37 = scalar_select %p36, 0, %s35
      %s38 = sadd.s32 1, %s29
      %s39 = scalar_select %p36, %s38, %s29
      %p40 = scmp.ge.s32.totalorder %s39, 2
      %s41 = scalar_select %p40, 0, %s39
      %s42 = ssub.s32 %s29, %s41
      %s43 = ssub.s32 %s30, %s37
      %s44 = sor.u32 %s42, %s43
      %p45 = scmp.eq.s32.totalorder %s44, 0
      %s47 = sadd.s32 %s46, 1
      %s48 = scalar_select %p45, %s46, %s47
      %p51 = pneg %p45
      %p52 = scmp.eq.s32.totalorder %s22, 1
      %p53 = por %p51, %p52
      %p54 = scmp.ne.s32.totalorder %s46, %s49
      %p55 = scmp.eq.s32.totalorder %s22, 0
      %p56 = por %p54, %p55
      %p57 = scmp.ne.s32.totalorder %s46, %s49
      %p58 = scmp.eq.s32.totalorder %s27, 1
      %p59 = por %p57, %p58
      %p60 = scmp.ne.s32.totalorder %s49, %s50
      %p61 = scmp.eq.s32.totalorder %s27, 0
      %p62 = por %p60, %p61
      %p63 = scmp.ne.s32.totalorder %s49, %s50
      %p64 = scmp.eq.s32.totalorder %s28, 1
      %p65 = por %p63, %p64
      %p67 = scmp.ne.s32.totalorder %s50, %s66
      %p68 = scmp.eq.s32.totalorder %s28, 0
      %p69 = por %p67, %p68
      %s70 = ssub.s32 %s29, %s41
      %s71 = ssub.s32 %s30, %s37
      %s72 = sor.u32 %s70, %s71
      %p73 = scmp.eq.s32.totalorder %s72, 0
      %s75 = sadd.s32 %s74, 1
      %s76 = scalar_select %p73, %s74, %s75
      %p79 = pneg %p73
      %p80 = scmp.eq.s32.totalorder %s22, 1
      %p81 = por %p79, %p80
      %p82 = scmp.ne.s32.totalorder %s74, %s77
      %p83 = scmp.eq.s32.totalorder %s22, 0
      %p84 = por %p82, %p83
      %p85 = scmp.ne.s32.totalorder %s74, %s77
      %p86 = scmp.eq.s32.totalorder %s27, 1
      %p87 = por %p85, %p86
      %p88 = scmp.ne.s32.totalorder %s77, %s78
      %p89 = scmp.eq.s32.totalorder %s27, 0
      %p90 = por %p88, %p89
      %p91 = scmp.ne.s32.totalorder %s77, %s78
      %p92 = scmp.eq.s32.totalorder %s28, 1
      %p93 = por %p91, %p92
      %p95 = scmp.ne.s32.totalorder %s78, %s94
      %p96 = scmp.eq.s32.totalorder %s28, 0
      %p97 = por %p95, %p96
      %s98 = ssub.s32 %s29, %s41
      %p99 = scmp.eq.s32.totalorder %s98, 0
      %s101 = sadd.s32 %s100, 1
      %s102 = scalar_select %p99, %s100, %s101
      %p105 = pneg %p99
      %p106 = scmp.eq.s32.totalorder %s22, 1
      %p107 = por %p105, %p106
      %p108 = scmp.ne.s32.totalorder %s100, %s103
      %p109 = scmp.eq.s32.totalorder %s22, 0
      %p110 = por %p108, %p109
      %p111 = scmp.ne.s32.totalorder %s100, %s103
      %p112 = scmp.eq.s32.totalorder %s27, 1
      %p113 = por %p111, %p112
      %p114 = scmp.ne.s32.totalorder %s103, %s104
      %p115 = scmp.eq.s32.totalorder %s27, 0
      %p116 = por %p114, %p115
      %p117 = scmp.ne.s32.totalorder %s103, %s104
      %p118 = scmp.eq.s32.totalorder %s28, 1
      %p119 = por %p117, %p118
      %p121 = scmp.ne.s32.totalorder %s104, %s120
      %p122 = scmp.eq.s32.totalorder %s28, 0
      %p123 = por %p121, %p122
      %s124 = ssub.s32 %s29, %s41
      %p125 = scmp.eq.s32.totalorder %s124, 0
      %s127 = sadd.s32 %s126, 1
      %s128 = scalar_select %p125, %s126, %s127
      %p131 = pneg %p125
      %p132 = scmp.eq.s32.totalorder %s22, 1
      %p133 = por %p131, %p132
      %p134 = scmp.ne.s32.totalorder %s126, %s129
      %p135 = scmp.eq.s32.totalorder %s22, 0
      %p136 = por %p134, %p135
      %p137 = scmp.ne.s32.totalorder %s126, %s129
      %p138 = scmp.eq.s32.totalorder %s27, 1
      %p139 = por %p137, %p138
      %p140 = scmp.ne.s32.totalorder %s129, %s130
      %p141 = scmp.eq.s32.totalorder %s27, 0
      %p142 = por %p140, %p141
      %p143 = scmp.ne.s32.totalorder %s129, %s130
      %p144 = scmp.eq.s32.totalorder %s28, 1
      %p145 = por %p143, %p144
      %p147 = scmp.ne.s32.totalorder %s130, %s146
      %p148 = scmp.eq.s32.totalorder %s28, 0
      %p149 = por %p147, %p148
      %p150 = scmp.le.s32.totalorder 1, %s22
      %p151 = scmp.lt.s32.totalorder %s22, 3
      %p152 = pnand %p150, %p151
      %p153 = pneg %p152
      // Predicated region
      $region9: #{tpu_custom_call.1} parent=5 // pred_check
        _
      $region10: #{tpu_custom_call.1} parent=5 // pred_check_branch
        %155 = sbr.rel (%p152) target = $region12
      $region11: #{tpu_custom_call.1} parent=5 // pred_region
        %s156 = ssub.s32 %s22, 1
      $region12: #{tpu_custom_call.1} parent=5 // pred_fallthru
        _
      %p157 = scmp.lt.s32.totalorder %s22, 2
      // Predicated region
      $region13: #{tpu_custom_call.1} parent=5 // pred_check
        %p158 = pneg %p157
      $region14: #{tpu_custom_call.1} parent=5 // pred_check_branch
        %160 = sbr.rel (%p158) target = $region16
      $region15: #{tpu_custom_call.1} parent=5 // pred_region
        // Predicated region
        $region17: #{tpu_custom_call.1} parent=15 // pred_check
          %p161 = pneg %p56
        $region18: #{tpu_custom_call.1} parent=15 // pred_check_branch
          %163 = sbr.rel (%p161) target = $region20
        $region19: #{tpu_custom_call.1} parent=15 // pred_region
          %s164 = sand.u32 %s46, 1
          %s165 = scalar_lea.sflag [#allocation7], %s164
          %s166 = sand.u32 %s46, 1
          %s167 = smul.addr %s166, 8
          %s168 = scalar_lea.vmem [#allocation6], %s167
          %s169 = smul.u32 2, %s30
          %s171 = ssub.s32 128, 128
          %172 = vsyncadd %s165, %s171
          %s173 = smul.addr %s29, 2
          %s174 = sadd.s32 %s169, %s173
          %s175 = smul.addr %s174, 64
          %s176 = scalar_lea.hbm %s0, %s175
          %s178 = sshll.u32 %s168, 4
          %s179 = int_to_ptr.vmem [resolvable:$true] %s178
          %181 = dma.hbm_to_vmem [thread:$0]  %s176, 128, %s179, %s165
        $region20: #{tpu_custom_call.1} parent=15 // pred_fallthru
          _
        // Predicated region
        $region21: #{tpu_custom_call.1} parent=15 // pred_check
          %p182 = pneg %p84
        $region22: #{tpu_custom_call.1} parent=15 // pred_check_branch
          %184 = sbr.rel (%p182) target = $region24
        $region23: #{tpu_custom_call.1} parent=15 // pred_region
          %s185 = sand.u32 %s74, 1
          %s186 = scalar_lea.sflag [#allocation10], %s185
          %s187 = sand.u32 %s74, 1
          %s188 = smul.addr %s187, 2
          %s189 = scalar_lea.vmem [#allocation9], %s188
          %s190 = smul.u32 2, %s30
          %s192 = ssub.s32 32, 32
          %193 = vsyncadd %s186, %s192
          %s194 = smul.addr %s29, 2
          %s195 = sadd.s32 %s190, %s194
          %s196 = smul.addr %s195, 16
          %s197 = scalar_lea.hbm %s1, %s196
          %s199 = sshll.u32 %s189, 4
          %s200 = int_to_ptr.vmem [resolvable:$true] %s199
          %202 = dma.hbm_to_vmem [thread:$0]  %s197, 32, %s200, %s186
        $region24: #{tpu_custom_call.1} parent=15 // pred_fallthru
          _
      $region16: #{tpu_custom_call.1} parent=5 // pred_fallthru
        _
      %p203 = scmp.le.s32.totalorder 1, %s22
      %p204 = scmp.lt.s32.totalorder %s22, 3
      %p205 = pnand %p203, %p204
      %p206 = pneg %p205
      // Predicated region
      $region25: #{tpu_custom_call.1} parent=5 // pred_check
        _
      $region26: #{tpu_custom_call.1} parent=5 // pred_check_branch
        %208 = sbr.rel (%p205) target = $region28
      $region27: #{tpu_custom_call.1} parent=5 // pred_region
        %s209 = ssub.s32 %s22, 1
        %s210 = sand.u32 %s49, 1
        %s211 = scalar_lea.sflag [#allocation7], %s210
        %s212 = sand.u32 %s49, 1
        %s213 = smul.addr %s212, 8
        %s214 = scalar_lea.vmem [#allocation6], %s213
        // Predicated region
        $region29: #{tpu_custom_call.1} parent=27 // pred_check
          %p215 = pneg %p62
        $region30: #{tpu_custom_call.1} parent=27 // pred_check_branch
          %217 = sbr.rel (%p215) target = $region32
        $region31: #{tpu_custom_call.1} parent=27 // pred_region
          %218 = dma.done %s211, 128
        $region32: #{tpu_custom_call.1} parent=27 // pred_fallthru
          _
        %s219 = sand.u32 %s77, 1
        %s220 = scalar_lea.sflag [#allocation10], %s219
        %s221 = sand.u32 %s77, 1
        %s222 = smul.addr %s221, 2
        %s223 = scalar_lea.vmem [#allocation9], %s222
        // Predicated region
        $region33: #{tpu_custom_call.1} parent=27 // pred_check
          %p224 = pneg %p90
        $region34: #{tpu_custom_call.1} parent=27 // pred_check_branch
          %226 = sbr.rel (%p224) target = $region36
        $region35: #{tpu_custom_call.1} parent=27 // pred_region
          %227 = dma.done %s220, 32
        $region36: #{tpu_custom_call.1} parent=27 // pred_fallthru
          _
        %s228 = sand.u32 %s49, 1
        %s229 = scalar_lea.sflag [#allocation7], %s228
        %s230 = sand.u32 %s49, 1
        %s231 = smul.addr %s230, 8
        %s232 = scalar_lea.vmem [#allocation6], %s231
        %p233 = pneg %p62
        %p234 = pneg %p59
        %s235 = sand.u32 %s77, 1
        %s236 = scalar_lea.sflag [#allocation10], %s235
        %s237 = sand.u32 %s77, 1
        %s238 = smul.addr %s237, 2
        %s239 = scalar_lea.vmem [#allocation9], %s238
        %p240 = pneg %p90
        %p241 = pneg %p87
        %p242 = pneg %p116
        %p243 = pneg %p113
        %s244 = sand.u32 %s103, 1
        %s245 = scalar_lea.sflag [#allocation8], %s244
        %s246 = sand.u32 %s103, 1
        %s247 = scalar_lea.vmem [#allocation11], %s246
        %p248 = pneg %p142
        %p249 = pneg %p139
        %s250 = sand.u32 %s129, 1
        %s251 = scalar_lea.sflag [#allocation13], %s250
        %s252 = sand.u32 %s129, 1
        %s253 = scalar_lea.vmem [#allocation12], %s252
        %s254 = smul.u32 2, %s32
        %s255 = smul.u32 2, %s32
        %p256 = scmp.eq.s32.totalorder %s32, 0
        // Predicated region
        $region37: #{tpu_custom_call.1} parent=27 // pred_check
          %p257 = pneg %p256
        $region38: #{tpu_custom_call.1} parent=27 // pred_check_branch
          %259 = sbr.rel (%p257) target = $region40
        $region39: #{tpu_custom_call.1} parent=27 // pred_region
          %vm260 = vcmask 3072
          %261 = vst.msk [vmem:[#allocation2] sm:$0xf] %vm260, 0.0
          %262 = vst.msk [vmem:[#allocation3] sm:$0xf] %vm260, 0.0
          %263 = vst.msk [vmem:[#allocation4] sm:$0xf] %vm260, 0.0
          %vm264 = vcmask 0
          %265 = vst.msk [vmem:[#allocation5] sm:$0x1] %vm264, 0.0
        $region40: #{tpu_custom_call.1} parent=27 // pred_fallthru
          _
        %v266 = vld [vmem:[%s214] sm:$0xff]
        %v267 = vld [vmem:[%s223] sm:$0x3]
        %v269 = vcombine.high %v266, %v266
        %vm271 = vcmask 1043456
        %v272 = vsel %vm271, %v266, -inf
        %v273 = vrot.slane %v272, 4
        %v274 = vmax.f32 %v272, %v273
        %v275 = vrot.slane %v274, 2
        %v276 = vmax.f32 %v274, %v275
        %v277 = vrot.slane %v276, 1
        %v278 = vmax.f32 %v276, %v277
        %v279 = vsel %vm271, %v269, -inf
        %v280 = vrot.slane %v279, 4
        %v281 = vmax.f32 %v279, %v280
        %v282 = vrot.slane %v281, 2
        %v283 = vmax.f32 %v281, %v282
        %v284 = vrot.slane %v283, 1
        %v285 = vmax.f32 %v283, %v284
        %v288 = vcombine.low %v278, %v285
        %v290 = vsub.f32 %v266, %v288
        %v291 = vmul.f32 %v290, 1.442695
        %v292 = vpow.pop %v291
        %v294 = vcombine.high %v292, %v292
        %v296 = vsel %vm271, %v292, 0.0
        %v297 = vrot.slane %v296, 4
        %v298 = vadd.f32 %v296, %v297
        %v299 = vrot.slane %v298, 2
        %v300 = vadd.f32 %v298, %v299
        %v301 = vrot.slane %v300, 1
        %v302 = vadd.f32 %v300, %v301
        %v303 = vsel %vm271, %v294, 0.0
        %v304 = vrot.slane %v303, 4
        %v305 = vadd.f32 %v303, %v304
        %v306 = vrot.slane %v305, 2
        %v307 = vadd.f32 %v305, %v306
        %v308 = vrot.slane %v307, 1
        %v309 = vadd.f32 %v307, %v308
        %v310 = vrcp.pop %v302
        %v311 = vrcp.pop %v309
        %v312 = vlog2.pop %v302
        %v313 = vmul.f32 %v312, 0.6931472
        %v314 = vlog2.pop %v309
        %v315 = vmul.f32 %v314, 0.6931472
        %v316 = vlaneseq
        %v317 = vshrl.u32 %v316, 7
        %v318 = vlaneseq
        %v319 = vshrl.u32 %v318, 7
        %v320 = vsub.s32 0, %v319
        %v321 = vrot.slane %v267, %v320
        %v322 = vlaneseq
        %v323 = vshrl.u32 %v322, 7
        %v324 = vsub.s32 1, %v323
        %v325 = vrot.slane %v267, %v324
        %vm326 = vcmp.eq.s32.totalorder %v317, %v321
        %vm327 = vcmp.eq.s32.totalorder %v317, %v325
        %v328 = vsel %vm326, 1, 0
        %v329 = vsel %vm327, 1, 0
        %v330 = vcvt.s32.f32 %v328
        %v331 = vcvt.s32.f32 %v329
        %v334 = vcombine.low %v310, %v311
        %v336 = vmul.f32 %v292, %v334
        %v337 = vld [vmem:[#allocation2] sm:$0xf]
        %v340 = vcombine.low %v330, %v331
        %v342 = vmul.f32 %v336, %v340
        %v344 = vcombine.high %v342, %v342
        %v346 = vsel %vm271, %v342, 0.0
        %v347 = vsel %vm271, %v344, 0.0
        %v348 = vadd.f32 %v346, %v347
        %349 = vadd.xlane.f32.xlu0 %v348
        %v350 = vpop.xlane.xlu0 %349
        %v351 = vadd.f32 %v337, %v350
        %vm352 = vcmask 3072
        %353 = vst.msk [vmem:[#allocation2] sm:$0xf] %vm352, %v351
        %v354 = vld [vmem:[#allocation3] sm:$0xf]
        %v356 = vcombine.high %v336, %v336
        %v358 = vsel %vm271, %v336, 0.0
        %v359 = vsel %vm271, %v356, 0.0
        %v360 = vadd.f32 %v358, %v359
        %361 = vadd.xlane.f32.xlu0 %v360
        %v362 = vpop.xlane.xlu0 %361
        %v363 = vadd.f32 %v354, %v362
        %364 = vst.msk [vmem:[#allocation3] sm:$0xf] %vm352, %v363
        %v365 = vld [vmem:[#allocation4] sm:$0xf]
        %v366 = vsel %vm271, %v330, 0.0
        %v367 = vsel %vm271, %v331, 0.0
        %v368 = vadd.f32 %v366, %v367
        %369 = vadd.xlane.f32.xlu0 %v368
        %v370 = vpop.xlane.xlu0 %369
        %v371 = vadd.f32 %v365, %v370
        %372 = vst.msk [vmem:[#allocation4] sm:$0xf] %vm352, %v371
        %v373 = vmul.f32 %v330, %v266
        %v374 = vmul.f32 %v331, %v269
        %v375 = vsel %vm271, %v373, 0.0
        %v376 = vrot.slane %v375, 4
        %v377 = vadd.f32 %v375, %v376
        %v378 = vrot.slane %v377, 2
        %v379 = vadd.f32 %v377, %v378
        %v380 = vrot.slane %v379, 1
        %v381 = vadd.f32 %v379, %v380
        %v382 = vsel %vm271, %v374, 0.0
        %v383 = vrot.slane %v382, 4
        %v384 = vadd.f32 %v382, %v383
        %v385 = vrot.slane %v384, 2
        %v386 = vadd.f32 %v384, %v385
        %v387 = vrot.slane %v386, 1
        %v388 = vadd.f32 %v386, %v387
        %v389 = vadd.f32 %v313, %v278
        %v390 = vadd.f32 %v315, %v285
        %v391 = vsub.f32 %v389, %v381
        %v392 = vsub.f32 %v390, %v388
        %v393 = vld [vmem:[#allocation5] sm:$0x1]
        %v394 = vadd.f32 %v391, %v392
        %395 = vadd.xlane.f32.xlu0 %v394
        %v396 = vpop.xlane.xlu0 %395
        %v397 = vadd.f32 %v393, %v396
        %vm398 = vcmask 0
        %399 = vst.msk [vmem:[#allocation5] sm:$0x1] %vm398, %v397
        // Predicated region
        $region41: #{tpu_custom_call.1} parent=27 // pred_check
          %p400 = pneg %p256
        $region42: #{tpu_custom_call.1} parent=27 // pred_check_branch
          %402 = sbr.rel (%p400) target = $region44
        $region43: #{tpu_custom_call.1} parent=27 // pred_region
          %v403 = vld [vmem:[#allocation2] sm:$0xf]
          %v404 = vmul.f32 %v403, 2.0
          %v405 = vadd.f32 %v404, 1.0
          %v406 = vld [vmem:[#allocation3] sm:$0xf]
          %v407 = vld [vmem:[#allocation4] sm:$0xf]
          %v408 = vadd.f32 %v406, %v407
          %v409 = vadd.f32 %v408, 1.0
          %v410 = vrcp.pop %v409
          %v411 = vmul.f32 %v405, %v410
          %v412 = vsel %vm352, %v411, 0.0
          %413 = vadd.xlane.f32.xlu0 %v412
          %v414 = vpop.xlane.xlu0 %413
          %v415 = vrot.slane %v414, 4
          %v416 = vadd.f32 %v414, %v415
          %v417 = vrot.slane %v416, 2
          %v418 = vadd.f32 %v416, %v417
          %v419 = vrot.slane %v418, 1
          %v420 = vadd.f32 %v418, %v419
          %s421 = vtos %v420
          %v422 = vld [vmem:[#allocation5] sm:$0x1]
          %424 = vset.pattern.permute.xlu0 0
          %425 = vperm.xlu0 %424, %v422
          %v426 = vpop.permute.xlu0 %425
          %v428 = vlaneseq
          %v429 = vshrl.u32 %v428, 7
          %v430 = vsub.s32 0, %v429
          %v431 = vrot.slane %v426, %v430
          %432 = vst [vmem:[%s247] sm:$0x1] %v431
          %v433 = vstv %s421
          %434 = vst [vmem:[%s253] sm:$0x1] %v433
        $region44: #{tpu_custom_call.1} parent=27 // pred_fallthru
          _
        %s435 = sand.u32 %s103, 1
        %s436 = scalar_lea.sflag [#allocation8], %s435
        %s437 = sand.u32 %s103, 1
        %s438 = scalar_lea.vmem [#allocation11], %s437
        %s439 = sand.u32 %s129, 1
        %s440 = scalar_lea.sflag [#allocation13], %s439
        %s441 = sand.u32 %s129, 1
        %s442 = scalar_lea.vmem [#allocation12], %s441
        // Predicated region
        $region45: #{tpu_custom_call.1} parent=27 // pred_check
          %p443 = pneg %p113
        $region46: #{tpu_custom_call.1} parent=27 // pred_check_branch
          %445 = sbr.rel (%p443) target = $region48
        $region47: #{tpu_custom_call.1} parent=27 // pred_region
          %s447 = ssub.s32 16, 16
          %448 = vsyncadd %s436, %s447
          %s449 = smul.addr %s31, 16
          %s450 = scalar_lea.hbm %s2, %s449
          %s452 = sshll.u32 %s438, 4
          %s453 = int_to_ptr.vmem [resolvable:$true] %s452
          %455 = dma.vmem_to_hbm [thread:$0]  %s453, 16, %s450, %s436
        $region48: #{tpu_custom_call.1} parent=27 // pred_fallthru
          _
        // Predicated region
        $region49: #{tpu_custom_call.1} parent=27 // pred_check
          %p456 = pneg %p139
        $region50: #{tpu_custom_call.1} parent=27 // pred_check_branch
          %458 = sbr.rel (%p456) target = $region52
        $region51: #{tpu_custom_call.1} parent=27 // pred_region
          %s460 = ssub.s32 16, 16
          %461 = vsyncadd %s440, %s460
          %s462 = smul.addr %s31, 16
          %s463 = scalar_lea.hbm %s3, %s462
          %s465 = sshll.u32 %s442, 4
          %s466 = int_to_ptr.vmem [resolvable:$true] %s465
          %468 = dma.vmem_to_hbm [thread:$0]  %s466, 16, %s463, %s440
        $region52: #{tpu_custom_call.1} parent=27 // pred_fallthru
          _
      $region28: #{tpu_custom_call.1} parent=5 // pred_fallthru
        _
      %p469 = scmp.le.s32.totalorder 2, %s22
      // Predicated region
      $region53: #{tpu_custom_call.1} parent=5 // pred_check
        %p470 = pneg %p469
      $region54: #{tpu_custom_call.1} parent=5 // pred_check_branch
        %472 = sbr.rel (%p470) target = $region56
      $region55: #{tpu_custom_call.1} parent=5 // pred_region
        %s473 = ssub.s32 %s22, 2
        // Predicated region
        $region57: #{tpu_custom_call.1} parent=55 // pred_check
          %p474 = pneg %p119
        $region58: #{tpu_custom_call.1} parent=55 // pred_check_branch
          %476 = sbr.rel (%p474) target = $region60
        $region59: #{tpu_custom_call.1} parent=55 // pred_region
          %s477 = sand.u32 %s104, 1
          %s478 = scalar_lea.sflag [#allocation8], %s477
          %s479 = sand.u32 %s104, 1
          %s480 = scalar_lea.vmem [#allocation11], %s479
          %481 = dma.done %s478, 16
        $region60: #{tpu_custom_call.1} parent=55 // pred_fallthru
          _
        // Predicated region
        $region61: #{tpu_custom_call.1} parent=55 // pred_check
          %p482 = pneg %p145
        $region62: #{tpu_custom_call.1} parent=55 // pred_check_branch
          %484 = sbr.rel (%p482) target = $region64
        $region63: #{tpu_custom_call.1} parent=55 // pred_region
          %s485 = sand.u32 %s130, 1
          %s486 = scalar_lea.sflag [#allocation13], %s485
          %s487 = sand.u32 %s130, 1
          %s488 = scalar_lea.vmem [#allocation12], %s487
          %489 = dma.done %s486, 16
        $region64: #{tpu_custom_call.1} parent=55 // pred_fallthru
          _
      $region56: #{tpu_custom_call.1} parent=5 // pred_fallthru
        _
    $region6: #{tpu_custom_call.1} parent=1 // loop_footer
      %s26 = sadd.s32 1, %s22
    $region7: #{tpu_custom_call.1} parent=1 // loop_footer_branch
      %21 = sbr.rel target = $region3
    $region8: #{tpu_custom_call.1} parent=1 // loop_exit
      _
    %490 = vsyncpa [#allocation7], 1
    %s491 = scalar_lea.sflag [#allocation7], 1
    %492 = vsyncpa %s491, 1
    %493 = vsyncpa [#allocation10], 1
    %s494 = scalar_lea.sflag [#allocation10], 1
    %495 = vsyncpa %s494, 1
    %496 = vsyncpa [#allocation8], 1
    %s497 = scalar_lea.sflag [#allocation8], 1
    %498 = vsyncpa %s497, 1
    %499 = vsyncpa [#allocation13], 1
    %s500 = scalar_lea.sflag [#allocation13], 1
    %501 = vsyncpa %s500, 1

</llo_original>
